<compile_context>
chip_gen: v6e
topology: v6e:2x2x1
jax: 0.10.0
libtpu: 0.0.40
codegen_flags: <defaults>
</compile_context>

<pallas_src>
import math

import jax
import jax.numpy as jnp
import numpy as np
from jax.experimental import pallas as pl
from jax.experimental.pallas import tpu as pltpu


def _mlp_rel_attn_kernel(xb_ref, wkq_ref, v_ref, wc_ref, b_ref,
                         out_ref, attn_ref):
    B, T, H = xb_ref.shape

    xb = xb_ref[...]                                   # (B, T, H) batch-major
    x2 = xb.reshape(B * T, H)                          # cheap merge (T % 8 == 0)

    # ---- hoisted projections: one fused MXU pass for key AND query vectors.
    # kq[:, :H] = tanh(x @ W_k), kq[:, H:] = tanh(x @ W_q)
    kq = jnp.tanh(jnp.dot(x2, wkq_ref[...],
                          preferred_element_type=jnp.float32))     # (B*T, 2H)
    kq = kq.reshape(B, T, 2 * H)
    k = kq[:, :, :H]                                   # (B, T, H) key vectors
    q = kq[:, :, H:]                                   # (B, T, H) query vectors

    # ---- all-pairs MLP scores: s[b, t, j] = v . tanh(q[b, t] + k[b, j])
    pre = jnp.tanh(q[:, :, None, :] + k[:, None, :, :])            # (B, T, T, H)
    s = jnp.sum(pre * v_ref[...][None, None], axis=-1)             # (B, T, T)

    # causal mask: step t attends to history j < t.  Finite NEG (not -inf)
    # keeps the fully-masked rows t < 2 (overwritten below) free of NaN.
    t_idx = jax.lax.broadcasted_iota(jnp.int32, (B, T, T), 1)
    j_idx = jax.lax.broadcasted_iota(jnp.int32, (B, T, T), 2)
    s = jnp.where(j_idx < t_idx, s, jnp.float32(-1e30))

    # softmax over the history (lane) axis; normalization on the EUP.
    m = jnp.max(s, axis=-1, keepdims=True)
    e = jnp.exp(s - m)                                 # masked entries -> 0
    denom = jnp.sum(e, axis=-1, keepdims=True)
    attn = e * pl.reciprocal(denom, approx=True)       # (B, T, T)
    attn_ref[...] = attn.astype(attn_ref.dtype)

    # ---- context vectors: batched MXU matmul over B.
    ctx = jnp.einsum('btj,bjh->bth', attn.astype(xb.dtype), xb,
                     preferred_element_type=jnp.float32)           # (B, T, H)

    # ---- gated output: tanh([x_t ; ctx_t] @ Wc + b), single fused matmul.
    cat = jnp.concatenate([x2.astype(jnp.float32),
                           ctx.reshape(B * T, H)], axis=-1)        # (B*T, 2H)
    out = jnp.tanh(jnp.dot(cat, wc_ref[...],
                           preferred_element_type=jnp.float32)
                   + b_ref[...])                                   # (B*T, H)
    out = out.reshape(B, T, H)

    # steps 0 and 1 are a pass-through of the raw input.
    step = jax.lax.broadcasted_iota(jnp.int32, (B, T, H), 1)
    out_ref[...] = jnp.where(step >= 2, out,
                             xb.astype(jnp.float32)).astype(out_ref.dtype)


@jax.jit
def _forward_arrays(inputs, W_k, W_q, weight_proj, concat_w, concat_b):
    """Dense part of the forward: returns (results (T,B,H), attn (B,T,T))."""
    T, B, H = inputs.shape
    x_b = jnp.transpose(inputs, (1, 0, 2))             # (B, T, H) batch-major
    w_kq = jnp.concatenate([W_k, W_q], axis=1)         # (H, 2H) fused RHS
    v_row = weight_proj.T                              # (1, H)
    wc = concat_w.T                                    # (2H, H): torch Linear y = x @ W.T + b
    b_row = concat_b.reshape(1, H)

    out_b, attn = pl.pallas_call(
        _mlp_rel_attn_kernel,
        out_shape=(
            jax.ShapeDtypeStruct((B, T, H), inputs.dtype),
            jax.ShapeDtypeStruct((B, T, T), jnp.float32),
        ),
        grid=(1,),
        in_specs=[
            pl.BlockSpec((B, T, H), lambda i: (0, 0, 0)),    # x (batch-major)
            pl.BlockSpec((H, 2 * H), lambda i: (0, 0)),      # [W_k | W_q]
            pl.BlockSpec((1, H), lambda i: (0, 0)),          # weight_proj^T
            pl.BlockSpec((2 * H, H), lambda i: (0, 0)),      # concat weight^T
            pl.BlockSpec((1, H), lambda i: (0, 0)),          # concat bias
        ],
        out_specs=(
            pl.BlockSpec((B, T, H), lambda i: (0, 0, 0)),
            pl.BlockSpec((B, T, T), lambda i: (0, 0, 0)),
        ),
        compiler_params=pltpu.CompilerParams(
            dimension_semantics=("parallel",),
            vmem_limit_bytes=32 * 1024 * 1024,
        ),
    )(x_b, w_kq, v_row, wc, b_row)

    results = jnp.transpose(out_b, (1, 0, 2))          # back to time-major
    return results, attn


def mlp_relative_attention(inputs, W_k, W_q, weight_proj, concat_w, concat_b):
    """inputs: (T, B, H). Returns (results (T, B, H), attention_thru_time list)."""
    T, B, H = inputs.shape
    results, attn = _forward_arrays(inputs, W_k, W_q, weight_proj,
                                    concat_w, concat_b)
    attention_thru_time = []
    for t in range(T):
        if t < 2:
            attention_thru_time.append(jnp.ones((1,), jnp.float32))
        else:
            # matches PyTorch shape (B, t, 1); attn is already (B, T_q, T_k)
            attention_thru_time.append(attn[:, t, :t][..., None])
    return results, attention_thru_time


def _reference(inputs, W_k, W_q, weight_proj, concat_w, concat_b):
    """Pure-JAX reference mirroring the PyTorch forward exactly."""
    T, B, H = inputs.shape
    Wc = concat_w.T
    outs, attns = [], []
    for t in range(T):
        if t < 2:
            outs.append(inputs[t])
            attns.append(jnp.ones((1,), jnp.float32))
        else:
            hidden = inputs[:t]                                    # (t, B, H)
            qv = inputs[t]                                         # (B, H)
            key = jnp.tanh(hidden @ W_k)                           # (t, B, H)
            qry = jnp.tanh(qv @ W_q)                               # (B, H)
            s = (jnp.tanh(key + qry[None]) @ weight_proj)[..., 0]  # (t, B)
            attn = jax.nn.softmax(s, axis=0)                       # (t, B)
            ctx = jnp.sum(hidden * attn[..., None], axis=0)        # (B, H)
            out = jnp.tanh(jnp.concatenate([qv, ctx], -1) @ Wc + concat_b)
            outs.append(out)
            attns.append(jnp.transpose(attn, (1, 0))[..., None])   # (B, t, 1)
    return jnp.stack(outs, axis=0), attns


def _xavier_uniform(key, shape, gain):
    fan_in, fan_out = shape[1], shape[0]
    bound = gain * math.sqrt(6.0 / (fan_in + fan_out))
    return jax.random.uniform(key, shape, jnp.float32, -bound, bound)


if __name__ == "__main__":
    T, B, H = 8, 2, 32            # seq_len, batch, nhid

    key = jax.random.PRNGKey(0)
    k_wk, k_wq, k_v, k_c, k_x = jax.random.split(key, 5)

    gain = math.sqrt(2.0)         # nn.init.calculate_gain('relu')
    W_k = _xavier_uniform(k_wk, (H, H), gain)
    W_q = _xavier_uniform(k_wq, (H, H), gain)
    weight_proj = _xavier_uniform(k_v, (H, 1), gain)
    concat_w = _xavier_uniform(k_c, (H, 2 * H), gain)   # torch Linear weight (out, in)
    concat_b = jnp.zeros((H,), jnp.float32)

    inputs = jax.random.normal(k_x, (T, B, H), jnp.float32)

    results, attention_thru_time = mlp_relative_attention(
        inputs, W_k, W_q, weight_proj, concat_w, concat_b)
    results = jax.block_until_ready(results)

    ref_results, ref_attn = _reference(inputs, W_k, W_q, weight_proj,
                                       concat_w, concat_b)
    # Tolerance accounts for the approximate EUP reciprocal used for the
    # softmax normalization (pl.reciprocal(..., approx=True)).
    np.testing.assert_allclose(np.asarray(results), np.asarray(ref_results),
                               rtol=1e-2, atol=1e-2)
    assert len(attention_thru_time) == T
    assert attention_thru_time[5].shape == (B, 5, 1)
    for t in range(2, T):
        np.testing.assert_allclose(np.asarray(attention_thru_time[t]),
                                   np.asarray(ref_attn[t]),
                                   rtol=1e-2, atol=1e-2)

    print("KERNEL_OK")
</pallas_src>

<mosaic_0001>
module attributes {stable_mosaic.version = 11 : i64} {
  func.func @_mlp_rel_attn_kernel(%arg0: i32, %arg1: memref<2x8x32xf32, #tpu.memory_space<vmem>>, %arg2: memref<32x64xf32, #tpu.memory_space<vmem>>, %arg3: memref<1x32xf32, #tpu.memory_space<vmem>>, %arg4: memref<64x32xf32, #tpu.memory_space<vmem>>, %arg5: memref<1x32xf32, #tpu.memory_space<vmem>>, %arg6: memref<2x8x32xf32, #tpu.memory_space<vmem>>, %arg7: memref<2x8x8xf32, #tpu.memory_space<vmem>>) attributes {dimension_semantics = [#tpu.dimension_semantics<parallel>], iteration_bounds = array<i64: 1>, scalar_prefetch = 0 : i64, scratch_operands = 0 : i64, tpu.core_type = #tpu.core_type<tc>, window_params = [{pipeline_mode = #tpu.pipeline_mode<synchronous>, transform_indices = @transform_0, window_bounds = array<i64: 2, 8, 32>}, {pipeline_mode = #tpu.pipeline_mode<synchronous>, transform_indices = @transform_1, window_bounds = array<i64: 32, 64>}, {pipeline_mode = #tpu.pipeline_mode<synchronous>, transform_indices = @transform_2, window_bounds = array<i64: 1, 32>}, {pipeline_mode = #tpu.pipeline_mode<synchronous>, transform_indices = @transform_3, window_bounds = array<i64: 64, 32>}, {pipeline_mode = #tpu.pipeline_mode<synchronous>, transform_indices = @transform_4, window_bounds = array<i64: 1, 32>}, {pipeline_mode = #tpu.pipeline_mode<synchronous>, transform_indices = @transform_5, window_bounds = array<i64: 2, 8, 32>}, {pipeline_mode = #tpu.pipeline_mode<synchronous>, transform_indices = @transform_6, window_bounds = array<i64: 2, 8, 8>}]} {
    %c0 = arith.constant 0 : index
    %c0_0 = arith.constant 0 : index
    %c0_1 = arith.constant 0 : index
    %0 = vector.load %arg1[%c0, %c0_0, %c0_1] : memref<2x8x32xf32, #tpu.memory_space<vmem>>, vector<2x8x32xf32>
    %1 = vector.shape_cast %0 : vector<2x8x32xf32> to vector<16x32xf32>
    %c0_2 = arith.constant 0 : index
    %c0_3 = arith.constant 0 : index
    %2 = vector.load %arg2[%c0_2, %c0_3] : memref<32x64xf32, #tpu.memory_space<vmem>>, vector<32x64xf32>
    %cst = arith.constant dense<0.000000e+00> : vector<16x64xf32>
    %3 = tpu.matmul %1, %2, %cst {dimension_numbers = #tpu.dot_dimension_numbers<[1], [0], [0], [1], [0, 0, 1, 1], [], []>} : vector<16x32xf32>, vector<32x64xf32>, vector<16x64xf32> -> vector<16x64xf32>
    %4 = math.tanh %3 : vector<16x64xf32>
    %5 = vector.shape_cast %4 : vector<16x64xf32> to vector<2x8x64xf32>
    %6 = vector.extract_strided_slice %5 {offsets = [0, 0, 0], sizes = [2, 8, 32], strides = [1, 1, 1]} : vector<2x8x64xf32> to vector<2x8x32xf32>
    %7 = vector.extract_strided_slice %5 {offsets = [0, 0, 32], sizes = [2, 8, 32], strides = [1, 1, 1]} : vector<2x8x64xf32> to vector<2x8x32xf32>
    %8 = vector.shape_cast %7 : vector<2x8x32xf32> to vector<2x8x1x32xf32>
    %9 = vector.shape_cast %6 : vector<2x8x32xf32> to vector<2x1x8x32xf32>
    %10 = vector.broadcast %8 : vector<2x8x1x32xf32> to vector<2x8x8x32xf32>
    %11 = vector.broadcast %9 : vector<2x1x8x32xf32> to vector<2x8x8x32xf32>
    %12 = arith.addf %10, %11 : vector<2x8x8x32xf32>
    %13 = math.tanh %12 : vector<2x8x8x32xf32>
    %c0_4 = arith.constant 0 : index
    %c0_5 = arith.constant 0 : index
    %14 = vector.load %arg3[%c0_4, %c0_5] : memref<1x32xf32, #tpu.memory_space<vmem>>, vector<1x32xf32>
    %15 = vector.shape_cast %14 : vector<1x32xf32> to vector<1x1x1x32xf32>
    %16 = vector.broadcast %15 : vector<1x1x1x32xf32> to vector<2x8x8x32xf32>
    %17 = arith.mulf %13, %16 : vector<2x8x8x32xf32>
    %cst_6 = arith.constant dense<0.000000e+00> : vector<2x8x8xf32>
    %18 = vector.multi_reduction <add>, %17, %cst_6 [3] : vector<2x8x8x32xf32> to vector<2x8x8xf32>
    %19 = tpu.iota {dimensions = array<i32: 1>} : vector<2x8x8xi32>
    %20 = tpu.iota {dimensions = array<i32: 2>} : vector<2x8x8xi32>
    %21 = arith.cmpi slt, %20, %19 : vector<2x8x8xi32>
    %cst_7 = arith.constant -1.000000e+30 : f32
    %22 = vector.broadcast %cst_7 : f32 to vector<2x8x8xf32>
    %23 = arith.select %21, %18, %22 : vector<2x8x8xi1>, vector<2x8x8xf32>
    %cst_8 = arith.constant dense<0xFF800000> : vector<2x8xf32>
    %24 = vector.multi_reduction <maximumf>, %23, %cst_8 [2] : vector<2x8x8xf32> to vector<2x8xf32>
    %25 = vector.shape_cast %24 : vector<2x8xf32> to vector<2x8x1xf32>
    %26 = vector.broadcast %25 : vector<2x8x1xf32> to vector<2x8x8xf32>
    %27 = arith.subf %23, %26 : vector<2x8x8xf32>
    %28 = math.exp %27 : vector<2x8x8xf32>
    %cst_9 = arith.constant dense<0.000000e+00> : vector<2x8xf32>
    %29 = vector.multi_reduction <add>, %28, %cst_9 [2] : vector<2x8x8xf32> to vector<2x8xf32>
    %30 = vector.shape_cast %29 : vector<2x8xf32> to vector<2x8x1xf32>
    %31 = tpu.reciprocal %30 {approx = true} : vector<2x8x1xf32> -> vector<2x8x1xf32>
    %32 = vector.broadcast %31 : vector<2x8x1xf32> to vector<2x8x8xf32>
    %33 = arith.mulf %28, %32 : vector<2x8x8xf32>
    %c0_10 = arith.constant 0 : index
    %c0_11 = arith.constant 0 : index
    %c0_12 = arith.constant 0 : index
    %34 = vector.load %arg7[%c0_10, %c0_11, %c0_12] : memref<2x8x8xf32, #tpu.memory_space<vmem>>, vector<2x8x8xf32>
    tpu.vector_store %arg7[%c0_10, %c0_11, %c0_12], %33 {strides = array<i32>} : memref<2x8x8xf32, #tpu.memory_space<vmem>>, vector<2x8x8xf32>,
    "tpu.trace_start"() <{level = 10 : i32, message = "btj,bjh->bth"}> : () -> ()
    %cst_13 = arith.constant dense<0.000000e+00> : vector<2x8x32xf32>
    %35 = tpu.matmul %33, %0, %cst_13 {dimension_numbers = #tpu.dot_dimension_numbers<[2], [1], [1], [2], [0, 0, 0, 1, 1, 2], [0], [0]>} : vector<2x8x8xf32>, vector<2x8x32xf32>, vector<2x8x32xf32> -> vector<2x8x32xf32>
    "tpu.trace_stop"() : () -> ()
    %36 = vector.shape_cast %35 : vector<2x8x32xf32> to vector<16x32xf32>
    %37 = tpu.concatenate %1, %36 in 1 : vector<16x32xf32>, vector<16x32xf32> -> vector<16x64xf32>
    %c0_14 = arith.constant 0 : index
    %c0_15 = arith.constant 0 : index
    %38 = vector.load %arg4[%c0_14, %c0_15] : memref<64x32xf32, #tpu.memory_space<vmem>>, vector<64x32xf32>
    %cst_16 = arith.constant dense<0.000000e+00> : vector<16x32xf32>
    %39 = tpu.matmul %37, %38, %cst_16 {dimension_numbers = #tpu.dot_dimension_numbers<[1], [0], [0], [1], [0, 0, 1, 1], [], []>} : vector<16x64xf32>, vector<64x32xf32>, vector<16x32xf32> -> vector<16x32xf32>
    %c0_17 = arith.constant 0 : index
    %c0_18 = arith.constant 0 : index
    %40 = vector.load %arg5[%c0_17, %c0_18] : memref<1x32xf32, #tpu.memory_space<vmem>>, vector<1x32xf32>
    %41 = vector.broadcast %40 : vector<1x32xf32> to vector<16x32xf32>
    %42 = arith.addf %39, %41 : vector<16x32xf32>
    %43 = math.tanh %42 : vector<16x32xf32>
    %44 = vector.shape_cast %43 : vector<16x32xf32> to vector<2x8x32xf32>
    %45 = tpu.iota {dimensions = array<i32: 1>} : vector<2x8x32xi32>
    %c2_i32 = arith.constant 2 : i32
    %46 = vector.broadcast %c2_i32 : i32 to vector<2x8x32xi32>
    %47 = arith.cmpi sge, %45, %46 : vector<2x8x32xi32>
    %48 = arith.select %47, %44, %0 : vector<2x8x32xi1>, vector<2x8x32xf32>
    %c0_19 = arith.constant 0 : index
    %c0_20 = arith.constant 0 : index
    %c0_21 = arith.constant 0 : index
    %49 = vector.load %arg6[%c0_19, %c0_20, %c0_21] : memref<2x8x32xf32, #tpu.memory_space<vmem>>, vector<2x8x32xf32>
    tpu.vector_store %arg6[%c0_19, %c0_20, %c0_21], %48 {strides = array<i32>} : memref<2x8x32xf32, #tpu.memory_space<vmem>>, vector<2x8x32xf32>,
    return
  }
  func.func @transform_0(%arg0: i32) -> (i32, i32, i32) {
    %c0_i32 = arith.constant 0 : i32
    %c0_i32_0 = arith.constant 0 : i32
    %c0_i32_1 = arith.constant 0 : i32
    %c0_i32_2 = arith.constant 0 : i32
    return %c0_i32, %c0_i32_0, %c0_i32_1 : i32, i32, i32
  }
  func.func @transform_1(%arg0: i32) -> (i32, i32) {
    %c0_i32 = arith.constant 0 : i32
    %c0_i32_0 = arith.constant 0 : i32
    %c0_i32_1 = arith.constant 0 : i32
    return %c0_i32, %c0_i32_0 : i32, i32
  }
  func.func @transform_2(%arg0: i32) -> (i32, i32) {
    %c0_i32 = arith.constant 0 : i32
    %c0_i32_0 = arith.constant 0 : i32
    %c0_i32_1 = arith.constant 0 : i32
    return %c0_i32, %c0_i32_0 : i32, i32
  }
  func.func @transform_3(%arg0: i32) -> (i32, i32) {
    %c0_i32 = arith.constant 0 : i32
    %c0_i32_0 = arith.constant 0 : i32
    %c0_i32_1 = arith.constant 0 : i32
    return %c0_i32, %c0_i32_0 : i32, i32
  }
  func.func @transform_4(%arg0: i32) -> (i32, i32) {
    %c0_i32 = arith.constant 0 : i32
    %c0_i32_0 = arith.constant 0 : i32
    %c0_i32_1 = arith.constant 0 : i32
    return %c0_i32, %c0_i32_0 : i32, i32
  }
  func.func @transform_5(%arg0: i32) -> (i32, i32, i32) {
    %c0_i32 = arith.constant 0 : i32
    %c0_i32_0 = arith.constant 0 : i32
    %c0_i32_1 = arith.constant 0 : i32
    %c0_i32_2 = arith.constant 0 : i32
    return %c0_i32, %c0_i32_0, %c0_i32_1 : i32, i32, i32
  }
  func.func @transform_6(%arg0: i32) -> (i32, i32, i32) {
    %c0_i32 = arith.constant 0 : i32
    %c0_i32_0 = arith.constant 0 : i32
    %c0_i32_1 = arith.constant 0 : i32
    %c0_i32_2 = arith.constant 0 : i32
    return %c0_i32, %c0_i32_0, %c0_i32_1 : i32, i32, i32
  }
}

</mosaic_0001>

<llo_original>
// kernel: _forward_arrays.1
$region0: #{_forward_arrays.1}
  #allocation0 [shape = 'u32[]', space=smem, size = 0x4, offset = 0x4, fixed_abs, tag = 'smem constant byte address 0x4 - core index']
  #allocation1 [shape = 'u32[144,128]{1,0:T(1,128)}', space=vmem, size = 0x12000, scoped, tag = 'internal scratch']
  %s0 = inlined_call_operand.vmem [shape: f32[2,8,32], index: 0, kind: input, shape index: {}]
  %s1 = inlined_call_operand.vmem [shape: f32[32,64], index: 1, kind: input, shape index: {}]
  %s2 = inlined_call_operand.vmem [shape: f32[1,32], index: 2, kind: input, shape index: {}]
  %s3 = inlined_call_operand.vmem [shape: f32[64,32], index: 3, kind: input, shape index: {}]
  %s4 = inlined_call_operand.vmem [shape: f32[1,32], index: 4, kind: input, shape index: {}]
  %s5 = inlined_call_operand.vmem [shape: f32[2,8,32], index: 5, kind: output, shape index: {0}]
  %s6 = inlined_call_operand.hbm [shape: f32[2,8,8], index: 6, kind: output, shape index: {1}]
  %7 = xla_tuple %s5, %s6
  %s8 = sld [smem:[#allocation0]]
  $region38: #{_forward_arrays.1} parent=0
    _
  %s10 = ssub.s32 1, %s8
  %s11 = scalar_select 0, %s10, %s8
  $region1: #{_forward_arrays.1} parent=0
    #allocation2 [shape = 'u8[8192]{0}', space=vmem, size = 0x2000, scoped, tag = 'output window, operand 1, single buffered']
    #allocation3 [shape = 's32[1]{0}', space=sflag, size = 0x4, scoped, tag = 'scoped memory for _forward_arrays.1']
    %12 = vsyncpa [#allocation3], 0
    // Predicated region
    $region2: #{_forward_arrays.1} parent=1 // pred_check
      _
    $region3: #{_forward_arrays.1} parent=1 // pred_check_branch
      %14 = sbr.rel (0) target = $region5
    $region4: #{_forward_arrays.1} parent=1 // pred_region
      _
    $region5: #{_forward_arrays.1} parent=1 // pred_fallthru
      _
    // Predicated region
    $region6: #{_forward_arrays.1} parent=1 // pred_check
      _
    $region7: #{_forward_arrays.1} parent=1 // pred_check_branch
      %16 = sbr.rel (0) target = $region9
    $region8: #{_forward_arrays.1} parent=1 // pred_region
      _
    $region9: #{_forward_arrays.1} parent=1 // pred_fallthru
      _
    // Predicated region
    $region10: #{_forward_arrays.1} parent=1 // pred_check
      _
    $region11: #{_forward_arrays.1} parent=1 // pred_check_branch
      %18 = sbr.rel (0) target = $region13
    $region12: #{_forward_arrays.1} parent=1 // pred_region
      _
    $region13: #{_forward_arrays.1} parent=1 // pred_fallthru
      _
    // Predicated region
    $region14: #{_forward_arrays.1} parent=1 // pred_check
      _
    $region15: #{_forward_arrays.1} parent=1 // pred_check_branch
      %20 = sbr.rel (0) target = $region17
    $region16: #{_forward_arrays.1} parent=1 // pred_region
      _
    $region17: #{_forward_arrays.1} parent=1 // pred_fallthru
      _
    // Predicated region
    $region18: #{_forward_arrays.1} parent=1 // pred_check
      _
    $region19: #{_forward_arrays.1} parent=1 // pred_check_branch
      %22 = sbr.rel (0) target = $region21
    $region20: #{_forward_arrays.1} parent=1 // pred_region
      _
    $region21: #{_forward_arrays.1} parent=1 // pred_fallthru
      _
    %v23 = vld [vmem:[%s0] sm:$0xff]
    %v24 = vld [vmem:[%s0 + $0x8] sm:$0xff]
    %v25 = vld [vmem:[%s1] sm:$0xff]
    %v26 = vld [vmem:[%s1 + $0x8] sm:$0xff]
    %v27 = vld [vmem:[%s1 + $0x10] sm:$0xff]
    %v28 = vld [vmem:[%s1 + $0x18] sm:$0xff]
    %vm29 = vcmask 261120
    %v31 = vsel %vm29, %v23, 0
    %v34 = vsel %vm29, %v24, 0
    %36 = vmatprep.subr.mxu0 0.0
    %37 = vmatpush1.msra.mxu0 0.0
    %38 = vmatprep.subr.mxu0 0.0
    %39 = vmatpush1.msra.mxu0 0.0
    %40 = vmatprep.subr.mxu0 0.0
    %41 = vmatpush1.msra.mxu0 0.0
    %42 = vmatprep.subr.mxu0 0.0
    %43 = vmatpush1.msra.mxu0 0.0
    %44 = vmatprep.subr.mxu0 0.0
    %45 = vmatpush1.msra.mxu0 0.0
    %46 = vmatprep.subr.mxu0 0.0
    %47 = vmatpush1.msra.mxu0 0.0
    %48 = vmatprep.subr.mxu0 0.0
    %49 = vmatpush1.msra.mxu0 0.0
    %50 = vmatprep.subr.mxu0 0.0
    %51 = vmatpush1.msra.mxu0 0.0
    %52 = vmatprep.subr.mxu0 0.0
    %53 = vmatpush1.msra.mxu0 0.0
    %54 = vmatprep.subr.mxu0 0.0
    %55 = vmatpush1.msra.mxu0 0.0
    %56 = vmatprep.subr.mxu0 0.0
    %57 = vmatpush1.msra.mxu0 0.0
    %58 = vmatprep.subr.mxu0 0.0
    %59 = vmatpush1.msra.mxu0 0.0
    %60 = vmatprep.subr.mxu0 0.0
    %61 = vmatpush1.msra.mxu0 %v28
    %62 = vmatprep.subr.mxu0 0.0
    %63 = vmatpush1.msra.mxu0 %v27
    %64 = vmatprep.subr.mxu0 0.0
    %65 = vmatpush1.msra.mxu0 %v26
    %66 = vmatprep.subr.mxu0 0.0
    %67 = vmatpush1.msra.mxu0 %v25
    %68 = vmatprep.subr.mxu0 0.0
    %69 = vmatpush2.msra.mxu0 0.0
    %70 = vmatprep.subr.mxu0 0.0
    %71 = vmatpush2.msra.mxu0 0.0
    %72 = vmatprep.subr.mxu0 0.0
    %73 = vmatpush2.msra.mxu0 0.0
    %74 = vmatprep.subr.mxu0 0.0
    %75 = vmatpush2.msra.mxu0 0.0
    %76 = vmatprep.subr.mxu0 0.0
    %77 = vmatpush2.msra.mxu0 0.0
    %78 = vmatprep.subr.mxu0 0.0
    %79 = vmatpush2.msra.mxu0 0.0
    %80 = vmatprep.subr.mxu0 0.0
    %81 = vmatpush2.msra.mxu0 0.0
    %82 = vmatprep.subr.mxu0 0.0
    %83 = vmatpush2.msra.mxu0 0.0
    %84 = vmatprep.subr.mxu0 0.0
    %85 = vmatpush2.msra.mxu0 0.0
    %86 = vmatprep.subr.mxu0 0.0
    %87 = vmatpush2.msra.mxu0 0.0
    %88 = vmatprep.subr.mxu0 0.0
    %89 = vmatpush2.msra.mxu0 0.0
    %90 = vmatprep.subr.mxu0 0.0
    %91 = vmatpush2.msra.mxu0 0.0
    %92 = vmatprep.subr.mxu0 0.0
    %93 = vmatpush2.msra.mxu0 0.0
    %94 = vmatprep.subr.mxu0 0.0
    %95 = vmatpush2.msra.mxu0 0.0
    %96 = vmatprep.subr.mxu0 0.0
    %97 = vmatpush2.msra.mxu0 0.0
    %98 = vmatprep.subr.mxu0 0.0
    %99 = vmatpush2.msra.mxu0 0.0
    %100 = vmatprep.mubr.f32.mxu0 0.0
    %101 = vmatmul.mubr.f32.gmra.mxu0 %v31
    %v102 = vpop.f32.mrf.mxu0
    %v103 = vadd.f32 0.0, %v102
    %v104 = vpop.f32.mrf.mxu0
    %105 = vmatprep.mubr.f32.mxu0 0.0
    %106 = vmatmul.mubr.f32.gmra.mxu0 %v34
    %v107 = vpop.f32.mrf.mxu0
    %v108 = vadd.f32 0.0, %v107
    %v109 = vpop.f32.mrf.mxu0
    %110 = vdwg.mxu0
    %v111 = vtanh.pop %v103
    %v112 = vtanh.pop %v108
    %v115 = vcombine.high %v111, %v111
    %v117 = vunpack.c.l.s4 1966171168
    %v118 = vunpack.c.0.s8 %v117
    %v119 = vlaneseq
    %v120 = vshrl.u32 %v119, 7
    %v121 = vsub.s32 %v118, %v120
    %v122 = vrot.slane %v111, %v121
    %v124 = vunpack.c.l.s4 1966171168
    %v125 = vunpack.c.0.s8 %v124
    %v126 = vlaneseq
    %v127 = vshrl.u32 %v126, 7
    %v128 = vsub.s32 %v125, %v127
    %v129 = vrot.slane %v115, %v128
    %v130 = vcombine.high %v122, %v122
    %v131 = vcombine.high %v129, %v129
    %v133 = vunpack.c.l.s4 1966171168
    %v134 = vunpack.c.0.s8 %v133
    %v135 = vlaneseq
    %v136 = vshrl.u32 %v135, 7
    %v137 = vsub.s32 %v134, %v136
    %v138 = vrot.slane %v122, %v137
    %v140 = vunpack.c.l.s4 1966171168
    %v141 = vunpack.c.0.s8 %v140
    %v142 = vlaneseq
    %v143 = vshrl.u32 %v142, 7
    %v144 = vsub.s32 %v141, %v143
    %v145 = vrot.slane %v129, %v144
    %v147 = vunpack.c.l.s4 1966171168
    %v148 = vunpack.c.0.s8 %v147
    %v149 = vlaneseq
    %v150 = vshrl.u32 %v149, 7
    %v151 = vsub.s32 %v148, %v150
    %v152 = vrot.slane %v130, %v151
    %v154 = vunpack.c.l.s4 1966171168
    %v155 = vunpack.c.0.s8 %v154
    %v156 = vlaneseq
    %v157 = vshrl.u32 %v156, 7
    %v158 = vsub.s32 %v155, %v157
    %v159 = vrot.slane %v131, %v158
    %v160 = vcombine.high %v138, %v138
    %v161 = vcombine.high %v145, %v145
    %v162 = vcombine.high %v152, %v152
    %v163 = vcombine.high %v159, %v159
    %v164 = vcombine.high %v112, %v112
    %v166 = vunpack.c.l.s4 1966171168
    %v167 = vunpack.c.0.s8 %v166
    %v168 = vlaneseq
    %v169 = vshrl.u32 %v168, 7
    %v170 = vsub.s32 %v167, %v169
    %v171 = vrot.slane %v112, %v170
    %v173 = vunpack.c.l.s4 1966171168
    %v174 = vunpack.c.0.s8 %v173
    %v175 = vlaneseq
    %v176 = vshrl.u32 %v175, 7
    %v177 = vsub.s32 %v174, %v176
    %v178 = vrot.slane %v164, %v177
    %v179 = vcombine.high %v171, %v171
    %v180 = vcombine.high %v178, %v178
    %v182 = vunpack.c.l.s4 1966171168
    %v183 = vunpack.c.0.s8 %v182
    %v184 = vlaneseq
    %v185 = vshrl.u32 %v184, 7
    %v186 = vsub.s32 %v183, %v185
    %v187 = vrot.slane %v171, %v186
    %v189 = vunpack.c.l.s4 1966171168
    %v190 = vunpack.c.0.s8 %v189
    %v191 = vlaneseq
    %v192 = vshrl.u32 %v191, 7
    %v193 = vsub.s32 %v190, %v192
    %v194 = vrot.slane %v178, %v193
    %v196 = vunpack.c.l.s4 1966171168
    %v197 = vunpack.c.0.s8 %v196
    %v198 = vlaneseq
    %v199 = vshrl.u32 %v198, 7
    %v200 = vsub.s32 %v197, %v199
    %v201 = vrot.slane %v179, %v200
    %v203 = vunpack.c.l.s4 1966171168
    %v204 = vunpack.c.0.s8 %v203
    %v205 = vlaneseq
    %v206 = vshrl.u32 %v205, 7
    %v207 = vsub.s32 %v204, %v206
    %v208 = vrot.slane %v180, %v207
    %v209 = vcombine.high %v187, %v187
    %v210 = vcombine.high %v194, %v194
    %v211 = vcombine.high %v201, %v201
    %v212 = vcombine.high %v208, %v208
    %v213 = vlaneseq
    %v214 = vshrl.u32 %v213, 7
    %v215 = vsub.s32 0, %v214
    %v216 = vrot.slane %v138, %v215
    %v217 = vlaneseq
    %v218 = vshrl.u32 %v217, 7
    %v219 = vsub.s32 0, %v218
    %v220 = vrot.slane %v152, %v219
    %v221 = vlaneseq
    %v222 = vshrl.u32 %v221, 7
    %v223 = vsub.s32 0, %v222
    %v224 = vrot.slane %v160, %v223
    %v225 = vlaneseq
    %v226 = vshrl.u32 %v225, 7
    %v227 = vsub.s32 0, %v226
    %v228 = vrot.slane %v162, %v227
    %v229 = vlaneseq
    %v230 = vshrl.u32 %v229, 7
    %v231 = vsub.s32 0, %v230
    %v232 = vrot.slane %v145, %v231
    %v233 = vlaneseq
    %v234 = vshrl.u32 %v233, 7
    %v235 = vsub.s32 0, %v234
    %v236 = vrot.slane %v159, %v235
    %v237 = vlaneseq
    %v238 = vshrl.u32 %v237, 7
    %v239 = vsub.s32 0, %v238
    %v240 = vrot.slane %v161, %v239
    %v241 = vlaneseq
    %v242 = vshrl.u32 %v241, 7
    %v243 = vsub.s32 0, %v242
    %v244 = vrot.slane %v163, %v243
    %v245 = vlaneseq
    %v246 = vshrl.u32 %v245, 7
    %v247 = vsub.s32 0, %v246
    %v248 = vrot.slane %v187, %v247
    %v249 = vlaneseq
    %v250 = vshrl.u32 %v249, 7
    %v251 = vsub.s32 0, %v250
    %v252 = vrot.slane %v201, %v251
    %v253 = vlaneseq
    %v254 = vshrl.u32 %v253, 7
    %v255 = vsub.s32 0, %v254
    %v256 = vrot.slane %v209, %v255
    %v257 = vlaneseq
    %v258 = vshrl.u32 %v257, 7
    %v259 = vsub.s32 0, %v258
    %v260 = vrot.slane %v211, %v259
    %v261 = vlaneseq
    %v262 = vshrl.u32 %v261, 7
    %v263 = vsub.s32 0, %v262
    %v264 = vrot.slane %v194, %v263
    %v265 = vlaneseq
    %v266 = vshrl.u32 %v265, 7
    %v267 = vsub.s32 0, %v266
    %v268 = vrot.slane %v208, %v267
    %v269 = vlaneseq
    %v270 = vshrl.u32 %v269, 7
    %v271 = vsub.s32 0, %v270
    %v272 = vrot.slane %v210, %v271
    %v273 = vlaneseq
    %v274 = vshrl.u32 %v273, 7
    %v275 = vsub.s32 0, %v274
    %v276 = vrot.slane %v212, %v275
    %293 = vrot.lane.b32.xlu0 %v111, 32
    %v294 = vpop.permute.xlu0 %293
    %295 = vrot.lane.b32.xlu0 %v112, 32
    %v296 = vpop.permute.xlu0 %295
    %v299 = vadd.f32 %v216, %v294
    %v300 = vadd.f32 %v220, %v294
    %v301 = vadd.f32 %v224, %v294
    %v302 = vadd.f32 %v228, %v294
    %v303 = vadd.f32 %v232, %v294
    %v304 = vadd.f32 %v236, %v294
    %v305 = vadd.f32 %v240, %v294
    %v306 = vadd.f32 %v244, %v294
    %v307 = vadd.f32 %v248, %v296
    %v308 = vadd.f32 %v252, %v296
    %v309 = vadd.f32 %v256, %v296
    %v310 = vadd.f32 %v260, %v296
    %v311 = vadd.f32 %v264, %v296
    %v312 = vadd.f32 %v268, %v296
    %v313 = vadd.f32 %v272, %v296
    %v314 = vadd.f32 %v276, %v296
    %v315 = vtanh.pop %v299
    %v316 = vtanh.pop %v300
    %v317 = vtanh.pop %v301
    %v318 = vtanh.pop %v302
    %v319 = vtanh.pop %v303
    %v320 = vtanh.pop %v304
    %v321 = vtanh.pop %v305
    %v322 = vtanh.pop %v306
    %v323 = vtanh.pop %v307
    %v324 = vtanh.pop %v308
    %v325 = vtanh.pop %v309
    %v326 = vtanh.pop %v310
    %v327 = vtanh.pop %v311
    %v328 = vtanh.pop %v312
    %v329 = vtanh.pop %v313
    %v330 = vtanh.pop %v314
    %v331 = vld [vmem:[%s2] sm:$0x1]
    %v333 = vlaneseq
    %v334 = vshrl.u32 %v333, 7
    %v335 = vsub.s32 0, %v334
    %v336 = vrot.slane %v331, %v335
    %337 = vrot.lane.b32.xlu0 %v336, 32
    %v338 = vpop.permute.xlu0 %337
    %v340 = vmul.f32 %v315, %v338
    %v341 = vmul.f32 %v316, %v338
    %v342 = vmul.f32 %v317, %v338
    %v343 = vmul.f32 %v318, %v338
    %v344 = vmul.f32 %v319, %v338
    %v345 = vmul.f32 %v320, %v338
    %v346 = vmul.f32 %v321, %v338
    %v347 = vmul.f32 %v322, %v338
    %v348 = vmul.f32 %v323, %v338
    %v349 = vmul.f32 %v324, %v338
    %v350 = vmul.f32 %v325, %v338
    %v351 = vmul.f32 %v326, %v338
    %v352 = vmul.f32 %v327, %v338
    %v353 = vmul.f32 %v328, %v338
    %v354 = vmul.f32 %v329, %v338
    %v355 = vmul.f32 %v330, %v338
    %372 = vrot.lane.b32.xlu0 %v340, 96
    %v373 = vpop.permute.xlu0 %372
    %374 = vrot.lane.b32.xlu0 %v341, 96
    %v375 = vpop.permute.xlu0 %374
    %376 = vrot.lane.b32.xlu0 %v342, 96
    %v377 = vpop.permute.xlu0 %376
    %378 = vrot.lane.b32.xlu0 %v343, 96
    %v379 = vpop.permute.xlu0 %378
    %380 = vrot.lane.b32.xlu0 %v344, 96
    %v381 = vpop.permute.xlu0 %380
    %382 = vrot.lane.b32.xlu0 %v345, 96
    %v383 = vpop.permute.xlu0 %382
    %384 = vrot.lane.b32.xlu0 %v346, 96
    %v385 = vpop.permute.xlu0 %384
    %386 = vrot.lane.b32.xlu0 %v347, 96
    %v387 = vpop.permute.xlu0 %386
    %388 = vrot.lane.b32.xlu0 %v348, 96
    %v389 = vpop.permute.xlu0 %388
    %390 = vrot.lane.b32.xlu0 %v349, 96
    %v391 = vpop.permute.xlu0 %390
    %392 = vrot.lane.b32.xlu0 %v350, 96
    %v393 = vpop.permute.xlu0 %392
    %394 = vrot.lane.b32.xlu0 %v351, 96
    %v395 = vpop.permute.xlu0 %394
    %396 = vrot.lane.b32.xlu0 %v352, 96
    %v397 = vpop.permute.xlu0 %396
    %398 = vrot.lane.b32.xlu0 %v353, 96
    %v399 = vpop.permute.xlu0 %398
    %400 = vrot.lane.b32.xlu0 %v354, 96
    %v401 = vpop.permute.xlu0 %400
    %402 = vrot.lane.b32.xlu0 %v355, 96
    %v403 = vpop.permute.xlu0 %402
    %v420 = vsel %vm29, %v373, 0.0
    %421 = vadd.xlane.f32.xlu0 %v420
    %v422 = vpop.xlane.xlu0 %421
    %v423 = vsel %vm29, %v375, 0.0
    %424 = vadd.xlane.f32.xlu0 %v423
    %v425 = vpop.xlane.xlu0 %424
    %v426 = vsel %vm29, %v377, 0.0
    %427 = vadd.xlane.f32.xlu0 %v426
    %v428 = vpop.xlane.xlu0 %427
    %v429 = vsel %vm29, %v379, 0.0
    %430 = vadd.xlane.f32.xlu0 %v429
    %v431 = vpop.xlane.xlu0 %430
    %v432 = vsel %vm29, %v381, 0.0
    %433 = vadd.xlane.f32.xlu0 %v432
    %v434 = vpop.xlane.xlu0 %433
    %v435 = vsel %vm29, %v383, 0.0
    %436 = vadd.xlane.f32.xlu0 %v435
    %v437 = vpop.xlane.xlu0 %436
    %v438 = vsel %vm29, %v385, 0.0
    %439 = vadd.xlane.f32.xlu0 %v438
    %v440 = vpop.xlane.xlu0 %439
    %v441 = vsel %vm29, %v387, 0.0
    %442 = vadd.xlane.f32.xlu0 %v441
    %v443 = vpop.xlane.xlu0 %442
    %v444 = vsel %vm29, %v389, 0.0
    %445 = vadd.xlane.f32.xlu0 %v444
    %v446 = vpop.xlane.xlu0 %445
    %v447 = vsel %vm29, %v391, 0.0
    %448 = vadd.xlane.f32.xlu0 %v447
    %v449 = vpop.xlane.xlu0 %448
    %v450 = vsel %vm29, %v393, 0.0
    %451 = vadd.xlane.f32.xlu0 %v450
    %v452 = vpop.xlane.xlu0 %451
    %v453 = vsel %vm29, %v395, 0.0
    %454 = vadd.xlane.f32.xlu0 %v453
    %v455 = vpop.xlane.xlu0 %454
    %v456 = vsel %vm29, %v397, 0.0
    %457 = vadd.xlane.f32.xlu0 %v456
    %v458 = vpop.xlane.xlu0 %457
    %v459 = vsel %vm29, %v399, 0.0
    %460 = vadd.xlane.f32.xlu0 %v459
    %v461 = vpop.xlane.xlu0 %460
    %v462 = vsel %vm29, %v401, 0.0
    %463 = vadd.xlane.f32.xlu0 %v462
    %v464 = vpop.xlane.xlu0 %463
    %v465 = vsel %vm29, %v403, 0.0
    %466 = vadd.xlane.f32.xlu0 %v465
    %v467 = vpop.xlane.xlu0 %466
    %v468 = vlaneseq
    %v469 = vshrl.u32 %v468, 7
    %v470 = vlaneseq
    %v471 = vand.u32 %v470, 127
    %vm472 = vcmp.lt.s32.totalorder %v471, %v469
    %v489 = vlaneseq
    %v490 = vshrl.u32 %v489, 7
    %v491 = vsub.s32 %v471, %v490
    %v492 = vrot.slane %v422, %v491
    %v493 = vlaneseq
    %v494 = vshrl.u32 %v493, 7
    %v495 = vsub.s32 %v471, %v494
    %v496 = vrot.slane %v425, %v495
    %v497 = vlaneseq
    %v498 = vshrl.u32 %v497, 7
    %v499 = vsub.s32 %v471, %v498
    %v500 = vrot.slane %v428, %v499
    %v501 = vlaneseq
    %v502 = vshrl.u32 %v501, 7
    %v503 = vsub.s32 %v471, %v502
    %v504 = vrot.slane %v431, %v503
    %v505 = vlaneseq
    %v506 = vshrl.u32 %v505, 7
    %v507 = vsub.s32 %v471, %v506
    %v508 = vrot.slane %v434, %v507
    %v509 = vlaneseq
    %v510 = vshrl.u32 %v509, 7
    %v511 = vsub.s32 %v471, %v510
    %v512 = vrot.slane %v437, %v511
    %v513 = vlaneseq
    %v514 = vshrl.u32 %v513, 7
    %v515 = vsub.s32 %v471, %v514
    %v516 = vrot.slane %v440, %v515
    %v517 = vlaneseq
    %v518 = vshrl.u32 %v517, 7
    %v519 = vsub.s32 %v471, %v518
    %v520 = vrot.slane %v443, %v519
    %v521 = vlaneseq
    %v522 = vshrl.u32 %v521, 7
    %v523 = vsub.s32 %v471, %v522
    %v524 = vrot.slane %v446, %v523
    %v525 = vlaneseq
    %v526 = vshrl.u32 %v525, 7
    %v527 = vsub.s32 %v471, %v526
    %v528 = vrot.slane %v449, %v527
    %v529 = vlaneseq
    %v530 = vshrl.u32 %v529, 7
    %v531 = vsub.s32 %v471, %v530
    %v532 = vrot.slane %v452, %v531
    %v533 = vlaneseq
    %v534 = vshrl.u32 %v533, 7
    %v535 = vsub.s32 %v471, %v534
    %v536 = vrot.slane %v455, %v535
    %v537 = vlaneseq
    %v538 = vshrl.u32 %v537, 7
    %v539 = vsub.s32 %v471, %v538
    %v540 = vrot.slane %v458, %v539
    %v541 = vlaneseq
    %v542 = vshrl.u32 %v541, 7
    %v543 = vsub.s32 %v471, %v542
    %v544 = vrot.slane %v461, %v543
    %v545 = vlaneseq
    %v546 = vshrl.u32 %v545, 7
    %v547 = vsub.s32 %v471, %v546
    %v548 = vrot.slane %v464, %v547
    %v549 = vlaneseq
    %v550 = vshrl.u32 %v549, 7
    %v551 = vsub.s32 %v471, %v550
    %v552 = vrot.slane %v467, %v551
    %vm553 = vcmask 1041409
    %v554 = vsel %vm553, %v496, %v492
    %vm555 = vcmask 1042434
    %v556 = vsel %vm555, %v500, %v554
    %vm557 = vcmask 1043459
    %v558 = vsel %vm557, %v504, %v556
    %vm559 = vcmask 1044484
    %v560 = vsel %vm559, %v508, %v558
    %vm561 = vcmask 1045509
    %v562 = vsel %vm561, %v512, %v560
    %vm563 = vcmask 1046534
    %v564 = vsel %vm563, %v516, %v562
    %vm565 = vcmask 1047559
    %v566 = vsel %vm565, %v520, %v564
    %v567 = vsel %vm553, %v528, %v524
    %v568 = vsel %vm555, %v532, %v567
    %v569 = vsel %vm557, %v536, %v568
    %v570 = vsel %vm559, %v540, %v569
    %v571 = vsel %vm561, %v544, %v570
    %v572 = vsel %vm563, %v548, %v571
    %v573 = vsel %vm565, %v552, %v572
    %v576 = vsel %vm472, %v566, -1e+30
    %v577 = vsel %vm472, %v573, -1e+30
    %vm578 = vcmask 64512
    %v579 = vsel %vm578, %v576, -inf
    %580 = vmax.xlane.f32.xlu0 %v579
    %v581 = vpop.xlane.xlu0 %580
    %v582 = vsel %vm578, %v577, -inf
    %583 = vmax.xlane.f32.xlu0 %v582
    %v584 = vpop.xlane.xlu0 %583
    %v585 = vsub.f32 %v576, %v581
    %v586 = vsub.f32 %v577, %v584
    %v587 = vmul.f32 %v585, 1.442695
    %v588 = vpow.pop %v587
    %v589 = vmul.f32 %v586, 1.442695
    %v590 = vpow.pop %v589
    %v591 = vsel %vm578, %v588, 0.0
    %592 = vadd.xlane.f32.xlu0 %v591
    %v593 = vpop.xlane.xlu0 %592
    %v594 = vsel %vm578, %v590, 0.0
    %595 = vadd.xlane.f32.xlu0 %v594
    %v596 = vpop.xlane.xlu0 %595
    %v597 = vrcp.pop %v593
    %v598 = vrcp.pop %v596
    %v599 = vmul.f32 %v588, %v597
    %v600 = vmul.f32 %v590, %v598
    %601 = vst.msk [vmem:[#allocation2] sm:$0xff] %vm578, %v599
    %602 = vst.msk [vmem:[#allocation2 + $0x8] sm:$0xff] %vm578, %v600
    %v604 = vsel %vm578, %v599, 0
    %606 = vmatprep.subr.mxu0 0.0
    %607 = vmatpush1.msra.mxu0 0.0
    %608 = vmatprep.subr.mxu0 0.0
    %609 = vmatpush1.msra.mxu0 0.0
    %610 = vmatprep.subr.mxu0 0.0
    %611 = vmatpush1.msra.mxu0 0.0
    %612 = vmatprep.subr.mxu0 0.0
    %613 = vmatpush1.msra.mxu0 0.0
    %614 = vmatprep.subr.mxu0 0.0
    %615 = vmatpush1.msra.mxu0 0.0
    %616 = vmatprep.subr.mxu0 0.0
    %617 = vmatpush1.msra.mxu0 0.0
    %618 = vmatprep.subr.mxu0 0.0
    %619 = vmatpush1.msra.mxu0 0.0
    %620 = vmatprep.subr.mxu0 0.0
    %621 = vmatpush1.msra.mxu0 0.0
    %622 = vmatprep.subr.mxu0 0.0
    %623 = vmatpush1.msra.mxu0 0.0
    %624 = vmatprep.subr.mxu0 0.0
    %625 = vmatpush1.msra.mxu0 0.0
    %626 = vmatprep.subr.mxu0 0.0
    %627 = vmatpush1.msra.mxu0 0.0
    %628 = vmatprep.subr.mxu0 0.0
    %629 = vmatpush1.msra.mxu0 0.0
    %630 = vmatprep.subr.mxu0 0.0
    %631 = vmatpush1.msra.mxu0 0.0
    %632 = vmatprep.subr.mxu0 0.0
    %633 = vmatpush1.msra.mxu0 0.0
    %634 = vmatprep.subr.mxu0 0.0
    %635 = vmatpush1.msra.mxu0 0.0
    %636 = vmatprep.subr.mxu0 0.0
    %637 = vmatpush1.msra.mxu0 %v23
    %638 = vmatprep.subr.mxu0 0.0
    %639 = vmatpush2.msra.mxu0 0.0
    %640 = vmatprep.subr.mxu0 0.0
    %641 = vmatpush2.msra.mxu0 0.0
    %642 = vmatprep.subr.mxu0 0.0
    %643 = vmatpush2.msra.mxu0 0.0
    %644 = vmatprep.subr.mxu0 0.0
    %645 = vmatpush2.msra.mxu0 0.0
    %646 = vmatprep.subr.mxu0 0.0
    %647 = vmatpush2.msra.mxu0 0.0
    %648 = vmatprep.subr.mxu0 0.0
    %649 = vmatpush2.msra.mxu0 0.0
    %650 = vmatprep.subr.mxu0 0.0
    %651 = vmatpush2.msra.mxu0 0.0
    %652 = vmatprep.subr.mxu0 0.0
    %653 = vmatpush2.msra.mxu0 0.0
    %654 = vmatprep.subr.mxu0 0.0
    %655 = vmatpush2.msra.mxu0 0.0
    %656 = vmatprep.subr.mxu0 0.0
    %657 = vmatpush2.msra.mxu0 0.0
    %658 = vmatprep.subr.mxu0 0.0
    %659 = vmatpush2.msra.mxu0 0.0
    %660 = vmatprep.subr.mxu0 0.0
    %661 = vmatpush2.msra.mxu0 0.0
    %662 = vmatprep.subr.mxu0 0.0
    %663 = vmatpush2.msra.mxu0 0.0
    %664 = vmatprep.subr.mxu0 0.0
    %665 = vmatpush2.msra.mxu0 0.0
    %666 = vmatprep.subr.mxu0 0.0
    %667 = vmatpush2.msra.mxu0 0.0
    %668 = vmatprep.subr.mxu0 0.0
    %669 = vmatpush2.msra.mxu0 0.0
    %670 = vmatprep.mubr.f32.mxu0 0.0
    %671 = vmatmul.mubr.f32.gmra.mxu0 %v604
    %v672 = vpop.f32.mrf.mxu0
    %v673 = vadd.f32 0.0, %v672
    %v674 = vpop.f32.mrf.mxu0
    %675 = vdwg.mxu0
    %v677 = vsel %vm578, %v600, 0
    %679 = vmatprep.subr.mxu0 0.0
    %680 = vmatpush1.msra.mxu0 0.0
    %681 = vmatprep.subr.mxu0 0.0
    %682 = vmatpush1.msra.mxu0 0.0
    %683 = vmatprep.subr.mxu0 0.0
    %684 = vmatpush1.msra.mxu0 0.0
    %685 = vmatprep.subr.mxu0 0.0
    %686 = vmatpush1.msra.mxu0 0.0
    %687 = vmatprep.subr.mxu0 0.0
    %688 = vmatpush1.msra.mxu0 0.0
    %689 = vmatprep.subr.mxu0 0.0
    %690 = vmatpush1.msra.mxu0 0.0
    %691 = vmatprep.subr.mxu0 0.0
    %692 = vmatpush1.msra.mxu0 0.0
    %693 = vmatprep.subr.mxu0 0.0
    %694 = vmatpush1.msra.mxu0 0.0
    %695 = vmatprep.subr.mxu0 0.0
    %696 = vmatpush1.msra.mxu0 0.0
    %697 = vmatprep.subr.mxu0 0.0
    %698 = vmatpush1.msra.mxu0 0.0
    %699 = vmatprep.subr.mxu0 0.0
    %700 = vmatpush1.msra.mxu0 0.0
    %701 = vmatprep.subr.mxu0 0.0
    %702 = vmatpush1.msra.mxu0 0.0
    %703 = vmatprep.subr.mxu0 0.0
    %704 = vmatpush1.msra.mxu0 0.0
    %705 = vmatprep.subr.mxu0 0.0
    %706 = vmatpush1.msra.mxu0 0.0
    %707 = vmatprep.subr.mxu0 0.0
    %708 = vmatpush1.msra.mxu0 0.0
    %709 = vmatprep.subr.mxu0 0.0
    %710 = vmatpush1.msra.mxu0 %v24
    %711 = vmatprep.subr.mxu0 0.0
    %712 = vmatpush2.msra.mxu0 0.0
    %713 = vmatprep.subr.mxu0 0.0
    %714 = vmatpush2.msra.mxu0 0.0
    %715 = vmatprep.subr.mxu0 0.0
    %716 = vmatpush2.msra.mxu0 0.0
    %717 = vmatprep.subr.mxu0 0.0
    %718 = vmatpush2.msra.mxu0 0.0
    %719 = vmatprep.subr.mxu0 0.0
    %720 = vmatpush2.msra.mxu0 0.0
    %721 = vmatprep.subr.mxu0 0.0
    %722 = vmatpush2.msra.mxu0 0.0
    %723 = vmatprep.subr.mxu0 0.0
    %724 = vmatpush2.msra.mxu0 0.0
    %725 = vmatprep.subr.mxu0 0.0
    %726 = vmatpush2.msra.mxu0 0.0
    %727 = vmatprep.subr.mxu0 0.0
    %728 = vmatpush2.msra.mxu0 0.0
    %729 = vmatprep.subr.mxu0 0.0
    %730 = vmatpush2.msra.mxu0 0.0
    %731 = vmatprep.subr.mxu0 0.0
    %732 = vmatpush2.msra.mxu0 0.0
    %733 = vmatprep.subr.mxu0 0.0
    %734 = vmatpush2.msra.mxu0 0.0
    %735 = vmatprep.subr.mxu0 0.0
    %736 = vmatpush2.msra.mxu0 0.0
    %737 = vmatprep.subr.mxu0 0.0
    %738 = vmatpush2.msra.mxu0 0.0
    %739 = vmatprep.subr.mxu0 0.0
    %740 = vmatpush2.msra.mxu0 0.0
    %741 = vmatprep.subr.mxu0 0.0
    %742 = vmatpush2.msra.mxu0 0.0
    %743 = vmatprep.mubr.f32.mxu0 0.0
    %744 = vmatmul.mubr.f32.gmra.mxu0 %v677
    %v745 = vpop.f32.mrf.mxu0
    %v746 = vadd.f32 0.0, %v745
    %v747 = vpop.f32.mrf.mxu0
    %748 = vdwg.mxu0
    %751 = vrot.lane.b32.xlu0 %v673, 32
    %v752 = vpop.permute.xlu0 %751
    %753 = vrot.lane.b32.xlu0 %v746, 32
    %v754 = vpop.permute.xlu0 %753
    %v757 = vsel %vm29, %v23, %v752
    %v758 = vsel %vm29, %v24, %v754
    %v759 = vld [vmem:[%s3] sm:$0xff]
    %v760 = vld [vmem:[%s3 + $0x8] sm:$0xff]
    %v761 = vld [vmem:[%s3 + $0x10] sm:$0xff]
    %v762 = vld [vmem:[%s3 + $0x18] sm:$0xff]
    %v763 = vld [vmem:[%s3 + $0x20] sm:$0xff]
    %v764 = vld [vmem:[%s3 + $0x28] sm:$0xff]
    %v765 = vld [vmem:[%s3 + $0x30] sm:$0xff]
    %v766 = vld [vmem:[%s3 + $0x38] sm:$0xff]
    %v767 = vld [vmem:[%s4] sm:$0x1]
    %v769 = vlaneseq
    %v770 = vshrl.u32 %v769, 7
    %v771 = vsub.s32 0, %v770
    %v772 = vrot.slane %v767, %v771
    %vm774 = vcmask 523264
    %v776 = vsel %vm774, %v757, 0
    %v779 = vsel %vm774, %v758, 0
    %781 = vmatprep.subr.mxu0 0.0
    %782 = vmatpush1.msra.mxu0 0.0
    %783 = vmatprep.subr.mxu0 0.0
    %784 = vmatpush1.msra.mxu0 0.0
    %785 = vmatprep.subr.mxu0 0.0
    %786 = vmatpush1.msra.mxu0 0.0
    %787 = vmatprep.subr.mxu0 0.0
    %788 = vmatpush1.msra.mxu0 0.0
    %789 = vmatprep.subr.mxu0 0.0
    %790 = vmatpush1.msra.mxu0 0.0
    %791 = vmatprep.subr.mxu0 0.0
    %792 = vmatpush1.msra.mxu0 0.0
    %793 = vmatprep.subr.mxu0 0.0
    %794 = vmatpush1.msra.mxu0 0.0
    %795 = vmatprep.subr.mxu0 0.0
    %796 = vmatpush1.msra.mxu0 0.0
    %797 = vmatprep.subr.mxu0 0.0
    %798 = vmatpush1.msra.mxu0 %v766
    %799 = vmatprep.subr.mxu0 0.0
    %800 = vmatpush1.msra.mxu0 %v765
    %801 = vmatprep.subr.mxu0 0.0
    %802 = vmatpush1.msra.mxu0 %v764
    %803 = vmatprep.subr.mxu0 0.0
    %804 = vmatpush1.msra.mxu0 %v763
    %805 = vmatprep.subr.mxu0 0.0
    %806 = vmatpush1.msra.mxu0 %v762
    %807 = vmatprep.subr.mxu0 0.0
    %808 = vmatpush1.msra.mxu0 %v761
    %809 = vmatprep.subr.mxu0 0.0
    %810 = vmatpush1.msra.mxu0 %v760
    %811 = vmatprep.subr.mxu0 0.0
    %812 = vmatpush1.msra.mxu0 %v759
    %813 = vmatprep.subr.mxu0 0.0
    %814 = vmatpush2.msra.mxu0 0.0
    %815 = vmatprep.subr.mxu0 0.0
    %816 = vmatpush2.msra.mxu0 0.0
    %817 = vmatprep.subr.mxu0 0.0
    %818 = vmatpush2.msra.mxu0 0.0
    %819 = vmatprep.subr.mxu0 0.0
    %820 = vmatpush2.msra.mxu0 0.0
    %821 = vmatprep.subr.mxu0 0.0
    %822 = vmatpush2.msra.mxu0 0.0
    %823 = vmatprep.subr.mxu0 0.0
    %824 = vmatpush2.msra.mxu0 0.0
    %825 = vmatprep.subr.mxu0 0.0
    %826 = vmatpush2.msra.mxu0 0.0
    %827 = vmatprep.subr.mxu0 0.0
    %828 = vmatpush2.msra.mxu0 0.0
    %829 = vmatprep.subr.mxu0 0.0
    %830 = vmatpush2.msra.mxu0 0.0
    %831 = vmatprep.subr.mxu0 0.0
    %832 = vmatpush2.msra.mxu0 0.0
    %833 = vmatprep.subr.mxu0 0.0
    %834 = vmatpush2.msra.mxu0 0.0
    %835 = vmatprep.subr.mxu0 0.0
    %836 = vmatpush2.msra.mxu0 0.0
    %837 = vmatprep.subr.mxu0 0.0
    %838 = vmatpush2.msra.mxu0 0.0
    %839 = vmatprep.subr.mxu0 0.0
    %840 = vmatpush2.msra.mxu0 0.0
    %841 = vmatprep.subr.mxu0 0.0
    %842 = vmatpush2.msra.mxu0 0.0
    %843 = vmatprep.subr.mxu0 0.0
    %844 = vmatpush2.msra.mxu0 0.0
    %845 = vmatprep.mubr.f32.mxu0 0.0
    %846 = vmatmul.mubr.f32.gmra.mxu0 %v776
    %v847 = vpop.f32.mrf.mxu0
    %v848 = vadd.f32 %v772, %v847
    %v849 = vpop.f32.mrf.mxu0
    %850 = vmatprep.mubr.f32.mxu0 0.0
    %851 = vmatmul.mubr.f32.gmra.mxu0 %v779
    %v852 = vpop.f32.mrf.mxu0
    %v853 = vadd.f32 %v772, %v852
    %v854 = vpop.f32.mrf.mxu0
    %855 = vdwg.mxu0
    %v856 = vtanh.pop %v848
    %v857 = vtanh.pop %v853
    %vm858 = vcmp.ge.s32.totalorder %v469, 2
    %v859 = vsel %vm858, %v856, %v23
    %v860 = vsel %vm858, %v857, %v24
    %861 = vst.msk [vmem:[%s5] sm:$0xff] %vm29, %v859
    %862 = vst.msk [vmem:[%s5 + $0x8] sm:$0xff] %vm29, %v860
    // Predicated region
    $region22: #{_forward_arrays.1} parent=1 // pred_check
      _
    $region23: #{_forward_arrays.1} parent=1 // pred_check_branch
      %864 = sbr.rel (0) target = $region25
    $region24: #{_forward_arrays.1} parent=1 // pred_region
      _
    $region25: #{_forward_arrays.1} parent=1 // pred_fallthru
      _
    // Predicated region
    $region26: #{_forward_arrays.1} parent=1 // pred_check
      _
    $region27: #{_forward_arrays.1} parent=1 // pred_check_branch
      %866 = sbr.rel (0) target = $region29
    $region28: #{_forward_arrays.1} parent=1 // pred_region
      %s868 = ssub.s32 256, 256
      %869 = vsyncadd [#allocation3], %s868
      %s870 = sshll.u32 [#allocation2], 4
      %s871 = int_to_ptr.vmem [resolvable:$true] %s870
      %876 = dma.vmem_to_hbm [thread:$0]  %s871, 256, %s6, [#allocation3], 128, 128, 8
    $region29: #{_forward_arrays.1} parent=1 // pred_fallthru
      _
    // Predicated region
    $region30: #{_forward_arrays.1} parent=1 // pred_check
      _
    $region31: #{_forward_arrays.1} parent=1 // pred_check_branch
      %878 = sbr.rel (0) target = $region33
    $region32: #{_forward_arrays.1} parent=1 // pred_region
      _
    $region33: #{_forward_arrays.1} parent=1 // pred_fallthru
      _
    // Predicated region
    $region34: #{_forward_arrays.1} parent=1 // pred_check
      _
    $region35: #{_forward_arrays.1} parent=1 // pred_check_branch
      %880 = sbr.rel (0) target = $region37
    $region36: #{_forward_arrays.1} parent=1 // pred_region
      %881 = dma.done [#allocation3], 256
    $region37: #{_forward_arrays.1} parent=1 // pred_fallthru
      _
    %882 = vsyncpa [#allocation3], 1

</llo_original>
